<compile_context>
chip_gen: v6e
topology: v6e:2x2x1
jax: 0.10.0
libtpu: 0.0.40
codegen_flags: <defaults>
</compile_context>

<pallas_src>
import functools

import jax
import jax.numpy as jnp
from jax import lax
from jax.experimental import pallas as pl
from jax.experimental.pallas import tpu as pltpu

BN_EPS = 1e-5


def _act_block(x, w, gamma, beta):
    """relu(batchnorm_train(x @ w)) for one full-batch, tn-wide feature tile."""
    # x: (B, Din) matmul dtype; w: (Din, tn) matmul dtype (pre-transposed in HBM).
    y = lax.dot_general(x, w, (((1,), (0,)), ((), ())),
                        preferred_element_type=jnp.float32)
    inv_b = jnp.float32(1.0 / y.shape[0])
    # One-pass training-mode batch statistics (exact: block spans the full batch).
    s1 = jnp.sum(y, axis=0, keepdims=True)
    s2 = jnp.sum(y * y, axis=0, keepdims=True)
    mean = s1 * inv_b
    var = jnp.maximum(s2 * inv_b - mean * mean, 0.0)
    # Fold the BN affine into a single per-feature scale/shift (FMA + ReLU).
    scale = gamma * lax.rsqrt(var + BN_EPS)
    shift = beta - mean * scale
    return jnp.maximum(y * scale + shift, 0.0)


def _act_kernel(x_ref, w_ref, g_ref, b_ref, out_ref):
    out_ref[...] = _act_block(x_ref[...], w_ref[...], g_ref[...], b_ref[...])


def _fused_kernel(g_act, x_ref, w_ref, g_ref, b_ref, xp_ref, out_ref):
    # Grid steps [0, g_act) compute the activation tiles; steps >= g_act copy
    # the x passthrough tiles directly into the concatenated output.
    j = pl.program_id(0)

    @pl.when(j < g_act)
    def _():
        out_ref[...] = _act_block(x_ref[...], w_ref[...], g_ref[...], b_ref[...])

    @pl.when(j >= g_act)
    def _():
        out_ref[...] = xp_ref[...].astype(out_ref.dtype)


def _vmem_budget_bytes():
    # Per-generation VMEM capacity (128 MiB v5e/v6e, 64 MiB v7x) minus headroom
    # for Pallas-internal scratch / semaphores.
    try:
        cap = int(pltpu.get_tpu_info().vmem_capacity_bytes)
    except Exception:
        cap = 64 << 20  # conservative (v7x-sized) fallback
    return max(cap - (16 << 20), 24 << 20)


def _pick_tile(dout, din, batch, mm_itemsize, budget):
    """Lane-aligned Dout tile: prefer multiples of 256, >= 2 grid steps, fits VMEM."""
    def fits(tn):
        need = (2 * batch * din * mm_itemsize      # x (double-buffered)
                + 2 * din * tn * mm_itemsize       # weight tile
                + 2 * 2 * tn * 4                   # gamma + beta tiles
                + 2 * batch * tn * 4               # output (act) tile
                + 2 * batch * tn * 4               # x passthrough tile (fused path)
                + (4 << 20))                       # internal scratch slack
        return need <= budget

    if dout % 128 != 0:
        # Odd widths: keep a single whole tile when small (fallback concat path).
        return dout if dout <= 512 else 256
    for tn in (2048, 1024, 512, 256, 128):
        if dout % tn == 0 and dout // tn >= 2 and fits(tn):
            return tn
    return dout if fits(dout) else 128


def residual_forward(x, weight, bias, gamma, beta, *, matmul_dtype=jnp.bfloat16):
    """Forward of Residual: concat([relu(bn(fc(x))), x], axis=1).

    x:      (B, Din)
    weight: (Dout, Din)  -- PyTorch nn.Linear layout (transposed once in HBM here).
    bias:   (Dout,)      -- accepted for API parity; cancelled exactly by the
                            training-mode BN mean subtraction, so unused.
    gamma, beta: (Dout,) -- BatchNorm1d affine parameters.
    """
    del bias  # mean(x @ W^T + b) subtraction removes b exactly (training-mode BN).

    B, din = x.shape
    dout = weight.shape[0]

    budget = _vmem_budget_bytes()
    itemsize = jnp.dtype(matmul_dtype).itemsize
    tn = _pick_tile(dout, din, B, itemsize, budget)

    x_mm = x.astype(matmul_dtype)
    w_t = weight.T.astype(matmul_dtype)          # (Din, Dout): one-time HBM transpose
    g2 = gamma.reshape(1, dout).astype(jnp.float32)
    b2 = beta.reshape(1, dout).astype(jnp.float32)

    cparams = pltpu.CompilerParams(
        dimension_semantics=("parallel",),
        vmem_limit_bytes=int(budget),
    )

    g_act = pl.cdiv(dout, tn)
    fused = (dout % tn == 0) and (tn % 128 == 0)

    if fused:
        # Fused concat: output is (B, Dout + Din); extra grid steps copy x.
        g_x = pl.cdiv(din, tn)
        x_pass = x.astype(jnp.float32)
        return pl.pallas_call(
            functools.partial(_fused_kernel, g_act),
            out_shape=jax.ShapeDtypeStruct((B, dout + din), jnp.float32),
            grid_spec=pltpu.PrefetchScalarGridSpec(
                num_scalar_prefetch=0,
                grid=(g_act + g_x,),
                in_specs=[
                    pl.BlockSpec((B, din), lambda j: (0, 0)),        # x (matmul)
                    pl.BlockSpec((din, tn),
                                 lambda j: (0, jnp.minimum(j, g_act - 1))),
                    pl.BlockSpec((1, tn),
                                 lambda j: (0, jnp.minimum(j, g_act - 1))),
                    pl.BlockSpec((1, tn),
                                 lambda j: (0, jnp.minimum(j, g_act - 1))),
                    pl.BlockSpec((B, tn),
                                 lambda j: (0, jnp.maximum(j - g_act, 0))),
                ],
                out_specs=pl.BlockSpec((B, tn), lambda j: (0, j)),
            ),
            compiler_params=cparams,
        )(x_mm, w_t, g2, b2, x_pass)

    # Fallback: lane-dense act kernel + XLA-level concat (unaligned Dout).
    act = pl.pallas_call(
        _act_kernel,
        out_shape=jax.ShapeDtypeStruct((B, dout), jnp.float32),
        grid_spec=pltpu.PrefetchScalarGridSpec(
            num_scalar_prefetch=0,
            grid=(g_act,),
            in_specs=[
                pl.BlockSpec((B, din), lambda j: (0, 0)),    # x: reused across tiles
                pl.BlockSpec((din, tn), lambda j: (0, j)),   # weight tile (pre-T)
                pl.BlockSpec((1, tn), lambda j: (0, j)),     # gamma tile
                pl.BlockSpec((1, tn), lambda j: (0, j)),     # beta tile
            ],
            out_specs=pl.BlockSpec((B, tn), lambda j: (0, j)),
        ),
        compiler_params=cparams,
    )(x_mm, w_t, g2, b2)
    return jnp.concatenate([act, x.astype(jnp.float32)], axis=1)


def _reference(x, weight, bias, gamma, beta):
    y = x @ weight.T + bias
    mean = jnp.mean(y, axis=0, keepdims=True)
    var = jnp.mean((y - mean) ** 2, axis=0, keepdims=True)
    out = jnp.maximum((y - mean) / jnp.sqrt(var + BN_EPS) * gamma + beta, 0.0)
    return jnp.concatenate([out, x], axis=1)


def _make_params(key, din, dout):
    kx, kw, kb, kg, kbeta = jax.random.split(key, 5)
    bound = 1.0 / jnp.sqrt(jnp.float32(din))
    weight = jax.random.uniform(kw, (dout, din), minval=-bound, maxval=bound,
                                dtype=jnp.float32)
    bias = jax.random.uniform(kb, (dout,), minval=-bound, maxval=bound,
                              dtype=jnp.float32)
    gamma = jax.random.uniform(kg, (dout,), minval=0.5, maxval=1.5,
                               dtype=jnp.float32)
    beta = 0.1 * jax.random.normal(kbeta, (dout,), dtype=jnp.float32)
    return kx, weight, bias, gamma, beta


if __name__ == "__main__":
    key = jax.random.PRNGKey(0)
    k1, k2 = jax.random.split(key)

    # ---- Case 1: small / unaligned Dout -> fallback (act kernel + XLA concat).
    B1, DIN1, DOUT1 = 8, 32, 64
    kx1, w1, bias1, g1, beta1 = _make_params(k1, DIN1, DOUT1)
    x1 = jax.random.normal(kx1, (B1, DIN1), dtype=jnp.float32)
    ref1 = _reference(x1, w1, bias1, g1, beta1)

    out1_f32 = jax.block_until_ready(
        residual_forward(x1, w1, bias1, g1, beta1, matmul_dtype=jnp.float32))
    assert out1_f32.shape == (B1, DOUT1 + DIN1), out1_f32.shape
    assert jnp.allclose(out1_f32, ref1, atol=5e-4, rtol=5e-4), \
        float(jnp.max(jnp.abs(out1_f32 - ref1)))

    out1_bf16 = jax.block_until_ready(
        residual_forward(x1, w1, bias1, g1, beta1))  # default bf16 operands
    assert out1_bf16.shape == (B1, DOUT1 + DIN1), out1_bf16.shape
    assert jnp.allclose(out1_bf16, ref1, atol=1e-1, rtol=1e-1), \
        float(jnp.max(jnp.abs(out1_bf16 - ref1)))

    # ---- Case 2: lane-aligned Dout/Din -> fused-concat path (>= 2 act tiles).
    B2, DIN2, DOUT2 = 8, 128, 256
    kx2, w2, bias2, g2, beta2 = _make_params(k2, DIN2, DOUT2)
    x2 = jax.random.normal(kx2, (B2, DIN2), dtype=jnp.float32)
    ref2 = _reference(x2, w2, bias2, g2, beta2)

    out2_f32 = jax.block_until_ready(
        residual_forward(x2, w2, bias2, g2, beta2, matmul_dtype=jnp.float32))
    assert out2_f32.shape == (B2, DOUT2 + DIN2), out2_f32.shape
    assert jnp.allclose(out2_f32, ref2, atol=5e-4, rtol=5e-4), \
        float(jnp.max(jnp.abs(out2_f32 - ref2)))
    # Passthrough columns must reproduce x exactly.
    assert jnp.array_equal(out2_f32[:, DOUT2:], x2)

    out2_bf16 = jax.block_until_ready(
        residual_forward(x2, w2, bias2, g2, beta2))  # default bf16 operands
    assert out2_bf16.shape == (B2, DOUT2 + DIN2), out2_bf16.shape
    assert jnp.allclose(out2_bf16, ref2, atol=1e-1, rtol=1e-1), \
        float(jnp.max(jnp.abs(out2_bf16 - ref2)))
    assert jnp.array_equal(out2_bf16[:, DOUT2:], x2)

    print("KERNEL_OK")
</pallas_src>

<mosaic_0001>
module attributes {stable_mosaic.version = 11 : i64} {
  func.func @_act_kernel(%arg0: i32, %arg1: memref<8x32xf32, #tpu.memory_space<vmem>>, %arg2: memref<32x64xf32, #tpu.memory_space<vmem>>, %arg3: memref<1x64xf32, #tpu.memory_space<vmem>>, %arg4: memref<1x64xf32, #tpu.memory_space<vmem>>, %arg5: memref<8x64xf32, #tpu.memory_space<vmem>>) attributes {dimension_semantics = [#tpu.dimension_semantics<parallel>], iteration_bounds = array<i64: 1>, scalar_prefetch = 0 : i64, scratch_operands = 0 : i64, tpu.core_type = #tpu.core_type<tc>, window_params = [{pipeline_mode = #tpu.pipeline_mode<synchronous>, transform_indices = @transform_0, window_bounds = array<i64: 8, 32>}, {transform_indices = @transform_1, window_bounds = array<i64: 32, 64>}, {transform_indices = @transform_2, window_bounds = array<i64: 1, 64>}, {transform_indices = @transform_3, window_bounds = array<i64: 1, 64>}, {transform_indices = @transform_4, window_bounds = array<i64: 8, 64>}]} {
    %c0 = arith.constant 0 : index
    %c0_0 = arith.constant 0 : index
    %0 = vector.load %arg1[%c0, %c0_0] : memref<8x32xf32, #tpu.memory_space<vmem>>, vector<8x32xf32>
    %c0_1 = arith.constant 0 : index
    %c0_2 = arith.constant 0 : index
    %1 = vector.load %arg2[%c0_1, %c0_2] : memref<32x64xf32, #tpu.memory_space<vmem>>, vector<32x64xf32>
    %c0_3 = arith.constant 0 : index
    %c0_4 = arith.constant 0 : index
    %2 = vector.load %arg3[%c0_3, %c0_4] : memref<1x64xf32, #tpu.memory_space<vmem>>, vector<1x64xf32>
    %c0_5 = arith.constant 0 : index
    %c0_6 = arith.constant 0 : index
    %3 = vector.load %arg4[%c0_5, %c0_6] : memref<1x64xf32, #tpu.memory_space<vmem>>, vector<1x64xf32>
    %cst = arith.constant dense<0.000000e+00> : vector<8x64xf32>
    %4 = tpu.matmul %0, %1, %cst {dimension_numbers = #tpu.dot_dimension_numbers<[1], [0], [0], [1], [0, 0, 1, 1], [], []>} : vector<8x32xf32>, vector<32x64xf32>, vector<8x64xf32> -> vector<8x64xf32>
    %cst_7 = arith.constant dense<0.000000e+00> : vector<64xf32>
    %5 = vector.multi_reduction <add>, %4, %cst_7 [0] : vector<8x64xf32> to vector<64xf32>
    %6 = vector.shape_cast %5 : vector<64xf32> to vector<1x64xf32>
    %7 = arith.mulf %4, %4 : vector<8x64xf32>
    %cst_8 = arith.constant dense<0.000000e+00> : vector<64xf32>
    %8 = vector.multi_reduction <add>, %7, %cst_8 [0] : vector<8x64xf32> to vector<64xf32>
    %9 = vector.shape_cast %8 : vector<64xf32> to vector<1x64xf32>
    %cst_9 = arith.constant 1.250000e-01 : f32
    %10 = vector.broadcast %cst_9 : f32 to vector<1x64xf32>
    %11 = arith.mulf %6, %10 : vector<1x64xf32>
    %cst_10 = arith.constant 1.250000e-01 : f32
    %12 = vector.broadcast %cst_10 : f32 to vector<1x64xf32>
    %13 = arith.mulf %9, %12 : vector<1x64xf32>
    %14 = arith.mulf %11, %11 : vector<1x64xf32>
    %15 = arith.subf %13, %14 : vector<1x64xf32>
    %cst_11 = arith.constant 0.000000e+00 : f32
    %16 = vector.broadcast %cst_11 : f32 to vector<1x64xf32>
    %17 = arith.maximumf %15, %16 : vector<1x64xf32>
    %cst_12 = arith.constant 9.99999974E-6 : f32
    %18 = vector.broadcast %cst_12 : f32 to vector<1x64xf32>
    %19 = arith.addf %17, %18 : vector<1x64xf32>
    %20 = math.rsqrt %19 : vector<1x64xf32>
    %21 = arith.mulf %2, %20 : vector<1x64xf32>
    %22 = arith.mulf %11, %21 : vector<1x64xf32>
    %23 = arith.subf %3, %22 : vector<1x64xf32>
    %24 = vector.broadcast %21 : vector<1x64xf32> to vector<8x64xf32>
    %25 = arith.mulf %4, %24 : vector<8x64xf32>
    %26 = vector.broadcast %23 : vector<1x64xf32> to vector<8x64xf32>
    %27 = arith.addf %25, %26 : vector<8x64xf32>
    %cst_13 = arith.constant 0.000000e+00 : f32
    %28 = vector.broadcast %cst_13 : f32 to vector<8x64xf32>
    %29 = arith.maximumf %27, %28 : vector<8x64xf32>
    %c0_14 = arith.constant 0 : index
    %c0_15 = arith.constant 0 : index
    %30 = vector.load %arg5[%c0_14, %c0_15] : memref<8x64xf32, #tpu.memory_space<vmem>>, vector<8x64xf32>
    tpu.vector_store %arg5[%c0_14, %c0_15], %29 {strides = array<i32>} : memref<8x64xf32, #tpu.memory_space<vmem>>, vector<8x64xf32>,
    return
  }
  func.func @transform_0(%arg0: i32) -> (i32, i32) {
    %c0_i32 = arith.constant 0 : i32
    %c0_i32_0 = arith.constant 0 : i32
    %c0_i32_1 = arith.constant 0 : i32
    return %c0_i32, %c0_i32_0 : i32, i32
  }
  func.func @transform_1(%arg0: i32) -> (i32, i32) {
    %c0_i32 = arith.constant 0 : i32
    %c0_i32_0 = arith.constant 0 : i32
    return %c0_i32, %arg0 : i32, i32
  }
  func.func @transform_2(%arg0: i32) -> (i32, i32) {
    %c0_i32 = arith.constant 0 : i32
    %c0_i32_0 = arith.constant 0 : i32
    return %c0_i32, %arg0 : i32, i32
  }
  func.func @transform_3(%arg0: i32) -> (i32, i32) {
    %c0_i32 = arith.constant 0 : i32
    %c0_i32_0 = arith.constant 0 : i32
    return %c0_i32, %arg0 : i32, i32
  }
  func.func @transform_4(%arg0: i32) -> (i32, i32) {
    %c0_i32 = arith.constant 0 : i32
    %c0_i32_0 = arith.constant 0 : i32
    return %c0_i32, %arg0 : i32, i32
  }
}

</mosaic_0001>

<llo_original>
// kernel: tpu_custom_call.1
$region0: #{tpu_custom_call.1}
  #allocation0 [shape = 'u32[]', space=smem, size = 0x4, offset = 0x4, fixed_abs, tag = 'smem constant byte address 0x4 - core index']
  #allocation1 [shape = 'u32[144,128]{1,0:T(1,128)}', space=vmem, size = 0x12000, scoped, tag = 'internal scratch']
  %s0 = inlined_call_operand.hbm [shape: f32[8,32], index: 0, kind: input, shape index: {}]
  %s1 = inlined_call_operand.hbm [shape: f32[32,64], index: 1, kind: input, shape index: {}]
  %s2 = inlined_call_operand.vmem [shape: f32[1,64], index: 2, kind: input, shape index: {}]
  %s3 = inlined_call_operand.vmem [shape: f32[1,64], index: 3, kind: input, shape index: {}]
  %s4 = inlined_call_operand.hbm [shape: f32[8,64], index: 4, kind: output, shape index: {}]
  %s5 = sld [smem:[#allocation0]]
  $region34: #{tpu_custom_call.1} parent=0
    _
  %s7 = ssub.s32 1, %s5
  %s8 = scalar_select 0, %s7, %s5
  $region1: #{tpu_custom_call.1} parent=0
    #allocation2 [shape = 'u8[4096]{0}', space=vmem, size = 0x1000, scoped, tag = 'input window, operand 0, single buffered']
    #allocation3 [shape = 's32[1]{0}', space=sflag, size = 0x4, scoped, tag = 'scoped memory for tpu_custom_call.1']
    #allocation4 [shape = 's32[1]{0}', space=sflag, size = 0x4, scoped, tag = 'scoped memory for tpu_custom_call.1']
    #allocation5 [shape = 'u8[16384]{0}', space=vmem, size = 0x4000, scoped, tag = 'input window, operand 1, single buffered']
    #allocation6 [shape = 's32[1]{0}', space=sflag, size = 0x4, scoped, tag = 'scoped memory for tpu_custom_call.1']
    #allocation7 [shape = 'u8[4096]{0}', space=vmem, size = 0x1000, scoped, tag = 'output window, operand 0, single buffered']
    %9 = vsyncpa [#allocation3], 0
    %10 = vsyncpa [#allocation6], 0
    %11 = vsyncpa [#allocation4], 0
    // Predicated region
    $region2: #{tpu_custom_call.1} parent=1 // pred_check
      _
    $region3: #{tpu_custom_call.1} parent=1 // pred_check_branch
      %13 = sbr.rel (0) target = $region5
    $region4: #{tpu_custom_call.1} parent=1 // pred_region
      %s15 = ssub.s32 128, 128
      %16 = vsyncadd [#allocation3], %s15
      %s18 = sshll.u32 [#allocation2], 4
      %s19 = int_to_ptr.vmem [resolvable:$true] %s18
      %21 = dma.hbm_to_vmem [thread:$0]  %s0, 128, %s19, [#allocation3]
    $region5: #{tpu_custom_call.1} parent=1 // pred_fallthru
      _
    // Predicated region
    $region6: #{tpu_custom_call.1} parent=1 // pred_check
      _
    $region7: #{tpu_custom_call.1} parent=1 // pred_check_branch
      %23 = sbr.rel (0) target = $region9
    $region8: #{tpu_custom_call.1} parent=1 // pred_region
      %s25 = ssub.s32 512, 512
      %26 = vsyncadd [#allocation6], %s25
      %s27 = sshll.u32 [#allocation5], 4
      %s28 = int_to_ptr.vmem [resolvable:$true] %s27
      %33 = dma.hbm_to_vmem [thread:$0]  %s1, 512, %s28, [#allocation6], 128, 128, 8
    $region9: #{tpu_custom_call.1} parent=1 // pred_fallthru
      _
    // Predicated region
    $region10: #{tpu_custom_call.1} parent=1 // pred_check
      _
    $region11: #{tpu_custom_call.1} parent=1 // pred_check_branch
      %35 = sbr.rel (0) target = $region13
    $region12: #{tpu_custom_call.1} parent=1 // pred_region
      _
    $region13: #{tpu_custom_call.1} parent=1 // pred_fallthru
      _
    // Predicated region
    $region14: #{tpu_custom_call.1} parent=1 // pred_check
      _
    $region15: #{tpu_custom_call.1} parent=1 // pred_check_branch
      %37 = sbr.rel (0) target = $region17
    $region16: #{tpu_custom_call.1} parent=1 // pred_region
      _
    $region17: #{tpu_custom_call.1} parent=1 // pred_fallthru
      _
    // Predicated region
    $region18: #{tpu_custom_call.1} parent=1 // pred_check
      _
    $region19: #{tpu_custom_call.1} parent=1 // pred_check_branch
      %39 = sbr.rel (0) target = $region21
    $region20: #{tpu_custom_call.1} parent=1 // pred_region
      %40 = dma.done [#allocation3], 128
    $region21: #{tpu_custom_call.1} parent=1 // pred_fallthru
      _
    // Predicated region
    $region22: #{tpu_custom_call.1} parent=1 // pred_check
      _
    $region23: #{tpu_custom_call.1} parent=1 // pred_check_branch
      %42 = sbr.rel (0) target = $region25
    $region24: #{tpu_custom_call.1} parent=1 // pred_region
      %43 = dma.done [#allocation6], 512
    $region25: #{tpu_custom_call.1} parent=1 // pred_fallthru
      _
    %v44 = vld [vmem:[#allocation2] sm:$0xff]
    %v45 = vld [vmem:[#allocation5] sm:$0xff]
    %v46 = vld [vmem:[#allocation5 + $0x8] sm:$0xff]
    %v47 = vld [vmem:[#allocation5 + $0x10] sm:$0xff]
    %v48 = vld [vmem:[#allocation5 + $0x18] sm:$0xff]
    %v49 = vld [vmem:[%s2] sm:$0x1]
    %v50 = vld [vmem:[%s3] sm:$0x1]
    %vm51 = vcmask 261120
    %v53 = vsel %vm51, %v44, 0
    %55 = vmatprep.subr.mxu0 0.0
    %56 = vmatpush1.msra.mxu0 0.0
    %57 = vmatprep.subr.mxu0 0.0
    %58 = vmatpush1.msra.mxu0 0.0
    %59 = vmatprep.subr.mxu0 0.0
    %60 = vmatpush1.msra.mxu0 0.0
    %61 = vmatprep.subr.mxu0 0.0
    %62 = vmatpush1.msra.mxu0 0.0
    %63 = vmatprep.subr.mxu0 0.0
    %64 = vmatpush1.msra.mxu0 0.0
    %65 = vmatprep.subr.mxu0 0.0
    %66 = vmatpush1.msra.mxu0 0.0
    %67 = vmatprep.subr.mxu0 0.0
    %68 = vmatpush1.msra.mxu0 0.0
    %69 = vmatprep.subr.mxu0 0.0
    %70 = vmatpush1.msra.mxu0 0.0
    %71 = vmatprep.subr.mxu0 0.0
    %72 = vmatpush1.msra.mxu0 0.0
    %73 = vmatprep.subr.mxu0 0.0
    %74 = vmatpush1.msra.mxu0 0.0
    %75 = vmatprep.subr.mxu0 0.0
    %76 = vmatpush1.msra.mxu0 0.0
    %77 = vmatprep.subr.mxu0 0.0
    %78 = vmatpush1.msra.mxu0 0.0
    %79 = vmatprep.subr.mxu0 0.0
    %80 = vmatpush1.msra.mxu0 %v48
    %81 = vmatprep.subr.mxu0 0.0
    %82 = vmatpush1.msra.mxu0 %v47
    %83 = vmatprep.subr.mxu0 0.0
    %84 = vmatpush1.msra.mxu0 %v46
    %85 = vmatprep.subr.mxu0 0.0
    %86 = vmatpush1.msra.mxu0 %v45
    %87 = vmatprep.subr.mxu0 0.0
    %88 = vmatpush2.msra.mxu0 0.0
    %89 = vmatprep.subr.mxu0 0.0
    %90 = vmatpush2.msra.mxu0 0.0
    %91 = vmatprep.subr.mxu0 0.0
    %92 = vmatpush2.msra.mxu0 0.0
    %93 = vmatprep.subr.mxu0 0.0
    %94 = vmatpush2.msra.mxu0 0.0
    %95 = vmatprep.subr.mxu0 0.0
    %96 = vmatpush2.msra.mxu0 0.0
    %97 = vmatprep.subr.mxu0 0.0
    %98 = vmatpush2.msra.mxu0 0.0
    %99 = vmatprep.subr.mxu0 0.0
    %100 = vmatpush2.msra.mxu0 0.0
    %101 = vmatprep.subr.mxu0 0.0
    %102 = vmatpush2.msra.mxu0 0.0
    %103 = vmatprep.subr.mxu0 0.0
    %104 = vmatpush2.msra.mxu0 0.0
    %105 = vmatprep.subr.mxu0 0.0
    %106 = vmatpush2.msra.mxu0 0.0
    %107 = vmatprep.subr.mxu0 0.0
    %108 = vmatpush2.msra.mxu0 0.0
    %109 = vmatprep.subr.mxu0 0.0
    %110 = vmatpush2.msra.mxu0 0.0
    %111 = vmatprep.subr.mxu0 0.0
    %112 = vmatpush2.msra.mxu0 0.0
    %113 = vmatprep.subr.mxu0 0.0
    %114 = vmatpush2.msra.mxu0 0.0
    %115 = vmatprep.subr.mxu0 0.0
    %116 = vmatpush2.msra.mxu0 0.0
    %117 = vmatprep.subr.mxu0 0.0
    %118 = vmatpush2.msra.mxu0 0.0
    %119 = vmatprep.mubr.f32.mxu0 0.0
    %120 = vmatmul.mubr.f32.gmra.mxu0 %v53
    %v121 = vpop.f32.mrf.mxu0
    %v122 = vadd.f32 0.0, %v121
    %v123 = vpop.f32.mrf.mxu0
    %124 = vdwg.mxu0
    %vm125 = vcmask 523264
    %v126 = vsel %vm125, %v122, 0.0
    %v127 = vrot.slane %v126, 4
    %v128 = vadd.f32 %v126, %v127
    %v129 = vrot.slane %v128, 2
    %v130 = vadd.f32 %v128, %v129
    %v131 = vrot.slane %v130, 1
    %v132 = vadd.f32 %v130, %v131
    %v133 = vmul.f32 %v122, %v122
    %v134 = vsel %vm125, %v133, 0.0
    %v135 = vrot.slane %v134, 4
    %v136 = vadd.f32 %v134, %v135
    %v137 = vrot.slane %v136, 2
    %v138 = vadd.f32 %v136, %v137
    %v139 = vrot.slane %v138, 1
    %v140 = vadd.f32 %v138, %v139
    %v141 = vmul.f32 %v132, 0.125
    %v142 = vmul.f32 %v140, 0.125
    %v143 = vmul.f32 %v141, %v141
    %v144 = vsub.f32 %v142, %v143
    %v145 = vmax.f32 %v144, 0.0
    %v146 = vadd.f32 %v145, 1e-05
    %v147 = vrsqrt.pop %v146
    %v148 = vmul.f32 %v49, %v147
    %v149 = vmul.f32 %v141, %v148
    %v150 = vsub.f32 %v50, %v149
    %v152 = vlaneseq
    %v153 = vshrl.u32 %v152, 7
    %v154 = vsub.s32 0, %v153
    %v155 = vrot.slane %v148, %v154
    %v157 = vmul.f32 %v122, %v155
    %v159 = vlaneseq
    %v160 = vshrl.u32 %v159, 7
    %v161 = vsub.s32 0, %v160
    %v162 = vrot.slane %v150, %v161
    %v164 = vadd.f32 %v157, %v162
    %v165 = vmax.f32 %v164, 0.0
    %166 = vst.msk [vmem:[#allocation7] sm:$0xff] %vm125, %v165
    // Predicated region
    $region26: #{tpu_custom_call.1} parent=1 // pred_check
      _
    $region27: #{tpu_custom_call.1} parent=1 // pred_check_branch
      %168 = sbr.rel (0) target = $region29
    $region28: #{tpu_custom_call.1} parent=1 // pred_region
      %s170 = ssub.s32 128, 128
      %171 = vsyncadd [#allocation4], %s170
      %s173 = sshll.u32 [#allocation7], 4
      %s174 = int_to_ptr.vmem [resolvable:$true] %s173
      %176 = dma.vmem_to_hbm [thread:$0]  %s174, 128, %s4, [#allocation4]
    $region29: #{tpu_custom_call.1} parent=1 // pred_fallthru
      _
    // Predicated region
    $region30: #{tpu_custom_call.1} parent=1 // pred_check
      _
    $region31: #{tpu_custom_call.1} parent=1 // pred_check_branch
      %178 = sbr.rel (0) target = $region33
    $region32: #{tpu_custom_call.1} parent=1 // pred_region
      %179 = dma.done [#allocation4], 128
    $region33: #{tpu_custom_call.1} parent=1 // pred_fallthru
      _
    %180 = vsyncpa [#allocation3], 1
    %181 = vsyncpa [#allocation6], 1
    %182 = vsyncpa [#allocation4], 1

</llo_original>
